<compile_context>
chip_gen: v5e
topology: v5e:2x2
jax: 0.10.0
libtpu: 0.0.40
codegen_flags: <defaults>
</compile_context>

<pallas_src>
import functools
from typing import NamedTuple

import jax
import jax.numpy as jnp
from jax import lax
from jax.experimental import pallas as pl
from jax.experimental.pallas import tpu as pltpu


def _round_up(x, m):
    return ((x + m - 1) // m) * m


def _vmem_cap_bytes():
    """~75% of this generation's physical per-TensorCore VMEM."""
    try:
        cap = int(pltpu.get_tpu_info().vmem_capacity_bytes)
    except Exception:
        cap = 64 << 20            # conservative (v7x-sized) fallback
    return max((cap * 3) // 4, 32 << 20)


class LinearBlockParams(NamedTuple):
    """Pre-padded / pre-cast parameters: pack once, reuse on every call."""
    params: jax.Array             # (3, Dp) f32  -- rows: gamma, beta, b2
    w1: jax.Array                 # (Dp, Hp) matmul_dtype
    b1: jax.Array                 # (1, Hp)  f32
    w2: jax.Array                 # (Hp, Dp) matmul_dtype
    dim: int                      # true feature dim D
    hidden: int                   # true hidden dim H
    tile_h: int                   # hidden-dim tile (== Hp when weights resident)
    vmem_cap: int                 # VMEM budget used for tile selection


def pack_linear_block_params(gamma, beta, w1, b1, w2, b2, *,
                             matmul_dtype=jnp.bfloat16, vmem_cap=None):
    """One-time packing: pad to lane-dense shapes, cast matmul operands, and
    pick the hidden-dim tiling (weight-resident when it fits the VMEM cap)."""
    D, H = w1.shape
    assert w2.shape == (H, D)
    f32 = jnp.float32
    Dp = _round_up(D, 128)
    md_bytes = jnp.dtype(matmul_dtype).itemsize
    cap = int(vmem_cap) if vmem_cap is not None else _vmem_cap_bytes()

    # Prefer full residency (constant weight index maps -> weights DMA'd from
    # HBM exactly once per call); otherwise stream H slices.
    Hp_full = _round_up(H, 128)
    resident_bytes = 2 * (Dp * Hp_full + Hp_full * Dp) * md_bytes + 2 * Hp_full * 4
    if resident_bytes <= (7 * cap) // 10:
        tile_h = Hp_full
    else:
        tile_h = 512
        while tile_h > 128 and 2 * 2 * Dp * tile_h * md_bytes > (4 * cap) // 10:
            tile_h //= 2
    Hp = _round_up(H, tile_h)

    w1p = jnp.pad(w1.astype(f32), ((0, Dp - D), (0, Hp - H))).astype(matmul_dtype)
    w2p = jnp.pad(w2.astype(f32), ((0, Hp - H), (0, Dp - D))).astype(matmul_dtype)
    b1p = jnp.pad(b1.astype(f32).reshape(1, H), ((0, 0), (0, Hp - H)))
    params = (jnp.zeros((3, Dp), f32)
              .at[0, :D].set(gamma.astype(f32))
              .at[1, :D].set(beta.astype(f32))
              .at[2, :D].set(b2.astype(f32)))
    return LinearBlockParams(params=params, w1=w1p, b1=b1p, w2=w2p,
                             dim=D, hidden=H, tile_h=tile_h, vmem_cap=cap)


def _linear_block_kernel(x_ref, p_ref, w1_ref, b1_ref, w2_ref, o_ref,
                         h0_ref, acc_ref, *, d_valid, inv_d, matmul_dtype):
    """Grid = (M tiles [parallel], H tiles [arbitrary / reduction])."""
    j = pl.program_id(1)

    # Once per M tile: LayerNorm + first ReLU into the h0 scratch; fold the
    # residual and the second-layer bias into the accumulator init.
    @pl.when(j == 0)
    def _():
        x = x_ref[...]                                      # (TM, Dp) f32
        gamma = p_ref[0:1, :]
        beta = p_ref[1:2, :]
        b2 = p_ref[2:3, :]
        mean = jnp.sum(x, axis=-1, keepdims=True) * inv_d   # pad cols are zero
        diff = x - mean
        dp = x.shape[-1]
        if d_valid != dp:                                   # static branch
            mask = lax.broadcasted_iota(jnp.int32, (1, dp), 1) < d_valid
            sq = jnp.where(mask, diff * diff, 0.0)
        else:
            sq = diff * diff
        var = jnp.sum(sq, axis=-1, keepdims=True) * inv_d
        xn = diff * lax.rsqrt(var + 1e-5) * gamma + beta    # gamma pad = 0
        h0_ref[...] = jnp.maximum(xn, 0.0).astype(h0_ref.dtype)
        acc_ref[...] = x + b2                               # residual + bias2

    # Per H tile: acc += relu(h0 @ W1_j + b1_j) @ W2_j (f32 accumulation).
    h1 = jnp.dot(h0_ref[...], w1_ref[...],
                 preferred_element_type=jnp.float32) + b1_ref[...]
    h1 = jnp.maximum(h1, 0.0).astype(matmul_dtype)
    acc_ref[...] += jnp.dot(h1, w2_ref[...],
                            preferred_element_type=jnp.float32)

    # Once per M tile: lane-dense output store.
    @pl.when(j == pl.num_programs(1) - 1)
    def _():
        o_ref[...] = acc_ref[...].astype(o_ref.dtype)


def linear_block_apply(x, p: LinearBlockParams, *, tile_m=None, out_dtype=None):
    """x: (..., D).  Returns x + lin2(relu(lin1(relu(LayerNorm(x)))))."""
    lead = x.shape[:-1]
    D = x.shape[-1]
    assert D == p.dim
    M = 1
    for s in lead:
        M *= s
    f32 = jnp.float32
    out_dtype = jnp.dtype(out_dtype) if out_dtype is not None else x.dtype
    matmul_dtype = p.w1.dtype
    md_bytes = jnp.dtype(matmul_dtype).itemsize
    out_bytes = jnp.dtype(out_dtype).itemsize
    Dp = p.params.shape[1]
    Hp = p.w1.shape[1]
    tile_h = p.tile_h
    cap = p.vmem_cap

    # ---- tile_m auto-selection against the VMEM budget ---------------------
    w_bytes = (2 * (Dp * tile_h + tile_h * Dp) * md_bytes     # W1 + W2 (dbl buf)
               + 2 * tile_h * 4 + 2 * 3 * Dp * 4)             # b1 + params slab

    def act_bytes(tm):                                        # x/out dbl buf + scratch
        return tm * Dp * (2 * 4 + 2 * out_bytes + md_bytes + 4)

    budget = cap - (4 << 20)                                  # Mosaic headroom
    if tile_m is None:
        tile_m = 1024
        while tile_m > 8 and w_bytes + act_bytes(tile_m) > budget:
            tile_m //= 2
    tile_m = max(8, min(tile_m, _round_up(M, 8)))
    if M >= 512:                                              # keep both v7x TCs busy
        tile_m = min(tile_m, max(256, _round_up(pl.cdiv(M, 2), 256)))

    grid = (pl.cdiv(M, tile_m), Hp // tile_h)
    vmem_limit = int(min(cap, max((w_bytes + act_bytes(tile_m)) * 3 // 2, 32 << 20)))

    # ---- activations: flatten rows; pad the feature dim only if needed -----
    x2 = x.reshape(M, D)
    if x2.dtype != f32:
        x2 = x2.astype(f32)
    if Dp != D:
        x2 = jnp.pad(x2, ((0, 0), (0, Dp - D)))

    kernel = functools.partial(
        _linear_block_kernel,
        d_valid=D, inv_d=1.0 / D, matmul_dtype=matmul_dtype)

    out = pl.pallas_call(
        kernel,
        out_shape=jax.ShapeDtypeStruct((M, Dp), out_dtype),
        grid_spec=pltpu.PrefetchScalarGridSpec(
            num_scalar_prefetch=0,
            grid=grid,
            in_specs=[
                pl.BlockSpec((tile_m, Dp), lambda i, j: (i, 0)),   # x rows
                pl.BlockSpec((3, Dp), lambda i, j: (0, 0)),        # gamma/beta/b2 slab
                pl.BlockSpec((Dp, tile_h), lambda i, j: (0, j)),   # W1 (const if resident)
                pl.BlockSpec((1, tile_h), lambda i, j: (0, j)),    # b1
                pl.BlockSpec((tile_h, Dp), lambda i, j: (j, 0)),   # W2 (const if resident)
            ],
            out_specs=pl.BlockSpec((tile_m, Dp), lambda i, j: (i, 0)),
            scratch_shapes=[
                pltpu.VMEM((tile_m, Dp), matmul_dtype),   # h0 = relu(LN(x))
                pltpu.VMEM((tile_m, Dp), jnp.float32),    # f32 accumulator
            ],
        ),
        compiler_params=pltpu.CompilerParams(
            dimension_semantics=("parallel", "arbitrary"),
            vmem_limit_bytes=vmem_limit,
        ),
    )(x2, p.params, p.w1, p.b1, p.w2)

    if Dp != D:
        out = out[:, :D]
    return out.reshape(*lead, D)


def linear_block(x, gamma, beta, w1, b1, w2, b2, *,
                 matmul_dtype=jnp.bfloat16, tile_m=None, out_dtype=None):
    """Convenience wrapper (packs every call).  Hot paths should call
    pack_linear_block_params() once and reuse the packed params."""
    packed = pack_linear_block_params(gamma, beta, w1, b1, w2, b2,
                                      matmul_dtype=matmul_dtype)
    return linear_block_apply(x, packed, tile_m=tile_m, out_dtype=out_dtype)


def reference(x, gamma, beta, w1, b1, w2, b2):
    mean = jnp.mean(x, axis=-1, keepdims=True)
    var = jnp.mean((x - mean) ** 2, axis=-1, keepdims=True)
    xn = (x - mean) * lax.rsqrt(var + 1e-5) * gamma + beta
    h = jnp.maximum(xn, 0.0)
    h = jnp.maximum(h @ w1 + b1, 0.0)
    return x + (h @ w2 + b2)


if __name__ == "__main__":
    key = jax.random.PRNGKey(0)
    B, S, D = 2, 8, 32            # input_dim = 32 -> hidden_dim = 128
    H = 4 * D

    k_x, k_g, k_b, k_w1, k_b1, k_w2, k_b2 = jax.random.split(key, 7)
    x = jax.random.normal(k_x, (B, S, D), dtype=jnp.float32)

    gamma = 1.0 + 0.1 * jax.random.normal(k_g, (D,), dtype=jnp.float32)
    beta = 0.1 * jax.random.normal(k_b, (D,), dtype=jnp.float32)
    lim1 = 1.0 / (D ** 0.5)
    lim2 = 1.0 / (H ** 0.5)
    # weights stored as (in_features, out_features) so the kernel computes x @ W
    w1 = jax.random.uniform(k_w1, (D, H), minval=-lim1, maxval=lim1, dtype=jnp.float32)
    b1 = jax.random.uniform(k_b1, (H,), minval=-lim1, maxval=lim1, dtype=jnp.float32)
    w2 = jax.random.uniform(k_w2, (H, D), minval=-lim2, maxval=lim2, dtype=jnp.float32)
    b2 = jax.random.uniform(k_b2, (D,), minval=-lim2, maxval=lim2, dtype=jnp.float32)

    ref = reference(x, gamma, beta, w1, b1, w2, b2)

    # Exact-fidelity f32 operand path (validates the fused kernel structure).
    packed_f32 = pack_linear_block_params(gamma, beta, w1, b1, w2, b2,
                                          matmul_dtype=jnp.float32)
    out = jax.block_until_ready(linear_block_apply(x, packed_f32))
    assert out.shape == (B, S, D) and out.dtype == x.dtype
    err = float(jnp.max(jnp.abs(out - ref)))
    assert jnp.allclose(out, ref, atol=1e-5, rtol=1e-5), err

    # Default bf16 MXU-operand path (f32 accumulation) -- the fast path on
    # v5e/v6e/v7x.  Re-validate tolerance at production D/H before relying on it.
    packed_bf16 = pack_linear_block_params(gamma, beta, w1, b1, w2, b2)
    out_bf = jax.block_until_ready(linear_block_apply(x, packed_bf16))
    err_bf = float(jnp.max(jnp.abs(out_bf - ref)))
    assert err_bf < 5e-2, err_bf

    print("KERNEL_OK")
</pallas_src>

<mosaic_0001>
module attributes {stable_mosaic.version = 11 : i64} {
  func.func @_linear_block_kernel(%arg0: i32, %arg1: i32, %arg2: memref<16x128xf32, #tpu.memory_space<vmem>>, %arg3: memref<3x128xf32, #tpu.memory_space<vmem>>, %arg4: memref<128x128xf32, #tpu.memory_space<vmem>>, %arg5: memref<1x128xf32, #tpu.memory_space<vmem>>, %arg6: memref<128x128xf32, #tpu.memory_space<vmem>>, %arg7: memref<16x128xf32, #tpu.memory_space<vmem>>, %arg8: memref<16x128xf32, #tpu.memory_space<vmem>>, %arg9: memref<16x128xf32, #tpu.memory_space<vmem>>) attributes {dimension_semantics = [#tpu.dimension_semantics<parallel>, #tpu.dimension_semantics<arbitrary>], iteration_bounds = array<i64: 1, 1>, scalar_prefetch = 0 : i64, scratch_operands = 2 : i64, tpu.core_type = #tpu.core_type<tc>, window_params = [{transform_indices = @transform_0, window_bounds = array<i64: 16, 128>}, {pipeline_mode = #tpu.pipeline_mode<synchronous>, transform_indices = @transform_1, window_bounds = array<i64: 3, 128>}, {transform_indices = @transform_2, window_bounds = array<i64: 128, 128>}, {transform_indices = @transform_3, window_bounds = array<i64: 1, 128>}, {transform_indices = @transform_4, window_bounds = array<i64: 128, 128>}, {transform_indices = @transform_5, window_bounds = array<i64: 16, 128>}]} {
    %c0_i32 = arith.constant 0 : i32
    %0 = arith.cmpi eq, %arg1, %c0_i32 : i32
    %1 = arith.extui %0 : i1 to i32
    %c0_i32_0 = arith.constant 0 : i32
    %2 = arith.cmpi ne, %1, %c0_i32_0 : i32
    scf.if %2 {
      %c0_16 = arith.constant 0 : index
      %c0_17 = arith.constant 0 : index
      %19 = vector.load %arg2[%c0_16, %c0_17] : memref<16x128xf32, #tpu.memory_space<vmem>>, vector<16x128xf32>
      %c0_18 = arith.constant 0 : index
      %c0_19 = arith.constant 0 : index
      %20 = vector.load %arg3[%c0_18, %c0_19] : memref<3x128xf32, #tpu.memory_space<vmem>>, vector<1x128xf32>
      %c1 = arith.constant 1 : index
      %c0_20 = arith.constant 0 : index
      %21 = vector.load %arg3[%c1, %c0_20] : memref<3x128xf32, #tpu.memory_space<vmem>>, vector<1x128xf32>
      %c2 = arith.constant 2 : index
      %c0_21 = arith.constant 0 : index
      %22 = vector.load %arg3[%c2, %c0_21] : memref<3x128xf32, #tpu.memory_space<vmem>>, vector<1x128xf32>
      %cst_22 = arith.constant dense<0.000000e+00> : vector<16xf32>
      %23 = vector.multi_reduction <add>, %19, %cst_22 [1] : vector<16x128xf32> to vector<16xf32>
      %24 = vector.shape_cast %23 : vector<16xf32> to vector<16x1xf32>
      %cst_23 = arith.constant 3.125000e-02 : f32
      %25 = vector.broadcast %cst_23 : f32 to vector<16x1xf32>
      %26 = arith.mulf %24, %25 : vector<16x1xf32>
      %27 = vector.broadcast %26 : vector<16x1xf32> to vector<16x128xf32>
      %28 = arith.subf %19, %27 : vector<16x128xf32>
      %29 = tpu.iota {dimensions = array<i32: 1>} : vector<1x128xi32>
      %c32_i32 = arith.constant 32 : i32
      %30 = vector.broadcast %c32_i32 : i32 to vector<1x128xi32>
      %31 = arith.cmpi slt, %29, %30 : vector<1x128xi32>
      %32 = arith.mulf %28, %28 : vector<16x128xf32>
      %cst_24 = arith.constant 0.000000e+00 : f32
      %33 = vector.shape_cast %31 : vector<1x128xi1> to vector<1x128xi1>
      %34 = vector.broadcast %33 : vector<1x128xi1> to vector<16x128xi1>
      %35 = vector.broadcast %cst_24 : f32 to vector<16x128xf32>
      %36 = arith.select %34, %32, %35 : vector<16x128xi1>, vector<16x128xf32>
      %cst_25 = arith.constant dense<0.000000e+00> : vector<16xf32>
      %37 = vector.multi_reduction <add>, %36, %cst_25 [1] : vector<16x128xf32> to vector<16xf32>
      %38 = vector.shape_cast %37 : vector<16xf32> to vector<16x1xf32>
      %cst_26 = arith.constant 3.125000e-02 : f32
      %39 = vector.broadcast %cst_26 : f32 to vector<16x1xf32>
      %40 = arith.mulf %38, %39 : vector<16x1xf32>
      %cst_27 = arith.constant 9.99999974E-6 : f32
      %41 = vector.broadcast %cst_27 : f32 to vector<16x1xf32>
      %42 = arith.addf %40, %41 : vector<16x1xf32>
      %43 = math.rsqrt %42 : vector<16x1xf32>
      %44 = vector.broadcast %43 : vector<16x1xf32> to vector<16x128xf32>
      %45 = arith.mulf %28, %44 : vector<16x128xf32>
      %46 = vector.broadcast %20 : vector<1x128xf32> to vector<16x128xf32>
      %47 = arith.mulf %45, %46 : vector<16x128xf32>
      %48 = vector.broadcast %21 : vector<1x128xf32> to vector<16x128xf32>
      %49 = arith.addf %47, %48 : vector<16x128xf32>
      %cst_28 = arith.constant 0.000000e+00 : f32
      %50 = vector.broadcast %cst_28 : f32 to vector<16x128xf32>
      %51 = arith.maximumf %49, %50 : vector<16x128xf32>
      %c0_29 = arith.constant 0 : index
      %c0_30 = arith.constant 0 : index
      %52 = vector.load %arg8[%c0_29, %c0_30] : memref<16x128xf32, #tpu.memory_space<vmem>>, vector<16x128xf32>
      tpu.vector_store %arg8[%c0_29, %c0_30], %51 {strides = array<i32>} : memref<16x128xf32, #tpu.memory_space<vmem>>, vector<16x128xf32>,
      %53 = vector.broadcast %22 : vector<1x128xf32> to vector<16x128xf32>
      %54 = arith.addf %19, %53 : vector<16x128xf32>
      %c0_31 = arith.constant 0 : index
      %c0_32 = arith.constant 0 : index
      %55 = vector.load %arg9[%c0_31, %c0_32] : memref<16x128xf32, #tpu.memory_space<vmem>>, vector<16x128xf32>
      tpu.vector_store %arg9[%c0_31, %c0_32], %54 {strides = array<i32>} : memref<16x128xf32, #tpu.memory_space<vmem>>, vector<16x128xf32>,
    } else {
    }
    %c0 = arith.constant 0 : index
    %c0_1 = arith.constant 0 : index
    %3 = vector.load %arg8[%c0, %c0_1] : memref<16x128xf32, #tpu.memory_space<vmem>>, vector<16x128xf32>
    %c0_2 = arith.constant 0 : index
    %c0_3 = arith.constant 0 : index
    %4 = vector.load %arg4[%c0_2, %c0_3] : memref<128x128xf32, #tpu.memory_space<vmem>>, vector<128x128xf32>
    %cst = arith.constant dense<0.000000e+00> : vector<16x128xf32>
    %5 = tpu.matmul %3, %4, %cst {dimension_numbers = #tpu.dot_dimension_numbers<[1], [0], [0], [1], [0, 0, 1, 1], [], []>} : vector<16x128xf32>, vector<128x128xf32>, vector<16x128xf32> -> vector<16x128xf32>
    %c0_4 = arith.constant 0 : index
    %c0_5 = arith.constant 0 : index
    %6 = vector.load %arg5[%c0_4, %c0_5] : memref<1x128xf32, #tpu.memory_space<vmem>>, vector<1x128xf32>
    %7 = vector.broadcast %6 : vector<1x128xf32> to vector<16x128xf32>
    %8 = arith.addf %5, %7 : vector<16x128xf32>
    %cst_6 = arith.constant 0.000000e+00 : f32
    %9 = vector.broadcast %cst_6 : f32 to vector<16x128xf32>
    %10 = arith.maximumf %8, %9 : vector<16x128xf32>
    %c0_7 = arith.constant 0 : index
    %c0_8 = arith.constant 0 : index
    %11 = vector.load %arg9[%c0_7, %c0_8] : memref<16x128xf32, #tpu.memory_space<vmem>>, vector<16x128xf32>
    %c0_9 = arith.constant 0 : index
    %c0_10 = arith.constant 0 : index
    %12 = vector.load %arg6[%c0_9, %c0_10] : memref<128x128xf32, #tpu.memory_space<vmem>>, vector<128x128xf32>
    %cst_11 = arith.constant dense<0.000000e+00> : vector<16x128xf32>
    %13 = tpu.matmul %10, %12, %cst_11 {dimension_numbers = #tpu.dot_dimension_numbers<[1], [0], [0], [1], [0, 0, 1, 1], [], []>} : vector<16x128xf32>, vector<128x128xf32>, vector<16x128xf32> -> vector<16x128xf32>
    %14 = arith.addf %11, %13 : vector<16x128xf32>
    %c0_12 = arith.constant 0 : index
    %c0_13 = arith.constant 0 : index
    %15 = vector.load %arg9[%c0_12, %c0_13] : memref<16x128xf32, #tpu.memory_space<vmem>>, vector<16x128xf32>
    tpu.vector_store %arg9[%c0_12, %c0_13], %14 {strides = array<i32>} : memref<16x128xf32, #tpu.memory_space<vmem>>, vector<16x128xf32>,
    %c0_i32_14 = arith.constant 0 : i32
    %16 = arith.cmpi eq, %arg1, %c0_i32_14 : i32
    %17 = arith.extui %16 : i1 to i32
    %c0_i32_15 = arith.constant 0 : i32
    %18 = arith.cmpi ne, %17, %c0_i32_15 : i32
    scf.if %18 {
      %c0_16 = arith.constant 0 : index
      %c0_17 = arith.constant 0 : index
      %19 = vector.load %arg9[%c0_16, %c0_17] : memref<16x128xf32, #tpu.memory_space<vmem>>, vector<16x128xf32>
      %c0_18 = arith.constant 0 : index
      %c0_19 = arith.constant 0 : index
      %20 = vector.load %arg7[%c0_18, %c0_19] : memref<16x128xf32, #tpu.memory_space<vmem>>, vector<16x128xf32>
      tpu.vector_store %arg7[%c0_18, %c0_19], %19 {strides = array<i32>} : memref<16x128xf32, #tpu.memory_space<vmem>>, vector<16x128xf32>,
    } else {
    }
    return
  }
  func.func @transform_0(%arg0: i32, %arg1: i32) -> (i32, i32) {
    %c0_i32 = arith.constant 0 : i32
    %c0_i32_0 = arith.constant 0 : i32
    return %arg0, %c0_i32 : i32, i32
  }
  func.func @transform_1(%arg0: i32, %arg1: i32) -> (i32, i32) {
    %c0_i32 = arith.constant 0 : i32
    %c0_i32_0 = arith.constant 0 : i32
    %c0_i32_1 = arith.constant 0 : i32
    return %c0_i32, %c0_i32_0 : i32, i32
  }
  func.func @transform_2(%arg0: i32, %arg1: i32) -> (i32, i32) {
    %c0_i32 = arith.constant 0 : i32
    %c0_i32_0 = arith.constant 0 : i32
    return %c0_i32, %arg1 : i32, i32
  }
  func.func @transform_3(%arg0: i32, %arg1: i32) -> (i32, i32) {
    %c0_i32 = arith.constant 0 : i32
    %c0_i32_0 = arith.constant 0 : i32
    return %c0_i32, %arg1 : i32, i32
  }
  func.func @transform_4(%arg0: i32, %arg1: i32) -> (i32, i32) {
    %c0_i32 = arith.constant 0 : i32
    %c0_i32_0 = arith.constant 0 : i32
    return %arg1, %c0_i32 : i32, i32
  }
  func.func @transform_5(%arg0: i32, %arg1: i32) -> (i32, i32) {
    %c0_i32 = arith.constant 0 : i32
    %c0_i32_0 = arith.constant 0 : i32
    return %arg0, %c0_i32 : i32, i32
  }
}

</mosaic_0001>

<llo_original>
// kernel: tpu_custom_call.1
$region0: #{tpu_custom_call.1}
  #allocation0 [shape = 'u32[]', space=smem, size = 0x4, offset = 0x4, fixed_abs, tag = 'smem constant byte address 0x4 - core index']
  #allocation1 [shape = 'u32[72,128]{1,0:T(1,128)}', space=vmem, size = 0x9000, scoped, tag = 'internal scratch']
  #allocation2 [shape = 'f32[16,128]{1,0:T(8,128)}', space=vmem, size = 0x2000, scoped, tag = 'scratch operand']
  #allocation3 [shape = 'f32[16,128]{1,0:T(8,128)}', space=vmem, size = 0x2000, scoped, tag = 'scratch operand']
  %s0 = inlined_call_operand.hbm [shape: f32[16,128], index: 0, kind: input, shape index: {}]
  %s1 = inlined_call_operand.hbm [shape: f32[3,128], index: 1, kind: input, shape index: {}]
  %s2 = inlined_call_operand.hbm [shape: f32[128,128], index: 2, kind: input, shape index: {}]
  %s3 = inlined_call_operand.vmem [shape: f32[1,128], index: 3, kind: input, shape index: {}]
  %s4 = inlined_call_operand.hbm [shape: f32[128,128], index: 4, kind: input, shape index: {}]
  %s5 = inlined_call_operand.hbm [shape: f32[16,128], index: 5, kind: output, shape index: {}]
  %s6 = sld [smem:[#allocation0]]
  $region54: #{tpu_custom_call.1} parent=0
    _
  %s8 = ssub.s32 1, %s6
  %s9 = scalar_select 0, %s8, %s6
  $region1: #{tpu_custom_call.1} parent=0
    #allocation4 [shape = 'u8[8192]{0}', space=vmem, size = 0x2000, scoped, tag = 'input window, operand 0, single buffered']
    #allocation5 [shape = 's32[1]{0}', space=sflag, size = 0x4, scoped, tag = 'scoped memory for tpu_custom_call.1']
    #allocation6 [shape = 's32[1]{0}', space=sflag, size = 0x4, scoped, tag = 'scoped memory for tpu_custom_call.1']
    #allocation7 [shape = 'u8[2048]{0}', space=vmem, size = 0x800, scoped, tag = 'input window, operand 1, single buffered']
    #allocation8 [shape = 's32[1]{0}', space=sflag, size = 0x4, scoped, tag = 'scoped memory for tpu_custom_call.1']
    #allocation9 [shape = 'u8[65536]{0}', space=vmem, size = 0x10000, scoped, tag = 'input window, operand 2, single buffered']
    #allocation10 [shape = 'u8[65536]{0}', space=vmem, size = 0x10000, scoped, tag = 'input window, operand 4, single buffered']
    #allocation11 [shape = 's32[1]{0}', space=sflag, size = 0x4, scoped, tag = 'scoped memory for tpu_custom_call.1']
    #allocation12 [shape = 'u8[8192]{0}', space=vmem, size = 0x2000, scoped, tag = 'output window, operand 0, single buffered']
    %10 = vsyncpa [#allocation5], 0
    %11 = vsyncpa [#allocation8], 0
    %12 = vsyncpa [#allocation11], 0
    %13 = vsyncpa [#allocation6], 0
    // Predicated region
    $region2: #{tpu_custom_call.1} parent=1 // pred_check
      _
    $region3: #{tpu_custom_call.1} parent=1 // pred_check_branch
      %15 = sbr.rel (0) target = $region5
    $region4: #{tpu_custom_call.1} parent=1 // pred_region
      %17 = vsyncadd [#allocation5], 0
      %s18 = sshll.u32 %s0, 4
      %s19 = int_to_ptr.hbm [resolvable:$true] %s18
      %s20 = sshll.u32 [#allocation4], 4
      %s21 = int_to_ptr.vmem [resolvable:$true] %s20
      %26 = dma.hbm_to_vmem [thread:$0]  %s19, 256, %s21, [#allocation5], 128, 128, 8
    $region5: #{tpu_custom_call.1} parent=1 // pred_fallthru
      _
    // Predicated region
    $region6: #{tpu_custom_call.1} parent=1 // pred_check
      _
    $region7: #{tpu_custom_call.1} parent=1 // pred_check_branch
      %28 = sbr.rel (0) target = $region9
    $region8: #{tpu_custom_call.1} parent=1 // pred_region
      %30 = vsyncadd [#allocation8], 0
      %s32 = sshll.u32 %s1, 4
      %s33 = int_to_ptr.hbm [resolvable:$true] %s32
      %s34 = sshll.u32 [#allocation7], 4
      %s35 = int_to_ptr.vmem [resolvable:$true] %s34
      %37 = dma.hbm_to_vmem [thread:$0]  %s33, 64, %s35, [#allocation8]
    $region9: #{tpu_custom_call.1} parent=1 // pred_fallthru
      _
    // Predicated region
    $region10: #{tpu_custom_call.1} parent=1 // pred_check
      _
    $region11: #{tpu_custom_call.1} parent=1 // pred_check_branch
      %39 = sbr.rel (0) target = $region13
    $region12: #{tpu_custom_call.1} parent=1 // pred_region
      %41 = vsyncadd [#allocation8], 0
      %s42 = sshll.u32 %s2, 4
      %s43 = int_to_ptr.hbm [resolvable:$true] %s42
      %s44 = sshll.u32 [#allocation9], 4
      %s45 = int_to_ptr.vmem [resolvable:$true] %s44
      %50 = dma.hbm_to_vmem [thread:$0]  %s43, 2048, %s45, [#allocation8], 128, 128, 8
    $region13: #{tpu_custom_call.1} parent=1 // pred_fallthru
      _
    // Predicated region
    $region14: #{tpu_custom_call.1} parent=1 // pred_check
      _
    $region15: #{tpu_custom_call.1} parent=1 // pred_check_branch
      %52 = sbr.rel (0) target = $region17
    $region16: #{tpu_custom_call.1} parent=1 // pred_region
      _
    $region17: #{tpu_custom_call.1} parent=1 // pred_fallthru
      _
    // Predicated region
    $region18: #{tpu_custom_call.1} parent=1 // pred_check
      _
    $region19: #{tpu_custom_call.1} parent=1 // pred_check_branch
      %54 = sbr.rel (0) target = $region21
    $region20: #{tpu_custom_call.1} parent=1 // pred_region
      %56 = vsyncadd [#allocation11], 0
      %s57 = sshll.u32 %s4, 4
      %s58 = int_to_ptr.hbm [resolvable:$true] %s57
      %s59 = sshll.u32 [#allocation10], 4
      %s60 = int_to_ptr.vmem [resolvable:$true] %s59
      %65 = dma.hbm_to_vmem [thread:$0]  %s58, 2048, %s60, [#allocation11], 128, 128, 8
    $region21: #{tpu_custom_call.1} parent=1 // pred_fallthru
      _
    // Predicated region
    $region22: #{tpu_custom_call.1} parent=1 // pred_check
      _
    $region23: #{tpu_custom_call.1} parent=1 // pred_check_branch
      %67 = sbr.rel (0) target = $region25
    $region24: #{tpu_custom_call.1} parent=1 // pred_region
      %69 = dma.done [#allocation5], 256
    $region25: #{tpu_custom_call.1} parent=1 // pred_fallthru
      _
    // Predicated region
    $region26: #{tpu_custom_call.1} parent=1 // pred_check
      _
    $region27: #{tpu_custom_call.1} parent=1 // pred_check_branch
      %71 = sbr.rel (0) target = $region29
    $region28: #{tpu_custom_call.1} parent=1 // pred_region
      %73 = dma.done [#allocation8], 64
    $region29: #{tpu_custom_call.1} parent=1 // pred_fallthru
      _
    // Predicated region
    $region30: #{tpu_custom_call.1} parent=1 // pred_check
      _
    $region31: #{tpu_custom_call.1} parent=1 // pred_check_branch
      %75 = sbr.rel (0) target = $region33
    $region32: #{tpu_custom_call.1} parent=1 // pred_region
      %77 = dma.done [#allocation8], 2048
    $region33: #{tpu_custom_call.1} parent=1 // pred_fallthru
      _
    // Predicated region
    $region34: #{tpu_custom_call.1} parent=1 // pred_check
      _
    $region35: #{tpu_custom_call.1} parent=1 // pred_check_branch
      %79 = sbr.rel (0) target = $region37
    $region36: #{tpu_custom_call.1} parent=1 // pred_region
      %81 = dma.done [#allocation11], 2048
    $region37: #{tpu_custom_call.1} parent=1 // pred_fallthru
      _
    %p82 = scmp.eq.s32.totalorder 0, 0
    // Predicated region
    $region38: #{tpu_custom_call.1} parent=1 // pred_check
      %p83 = pneg %p82
    $region39: #{tpu_custom_call.1} parent=1 // pred_check_branch
      %85 = sbr.rel (%p83) target = $region41
    $region40: #{tpu_custom_call.1} parent=1 // pred_region
      %v86 = vld [vmem:[#allocation4] sm:$0xff]
      %v87 = vld [vmem:[#allocation4 + $0x8] sm:$0xff]
      %v88 = vld [vmem:[#allocation7] sm:$0x1]
      %v89 = vld [vmem:[#allocation7 + $0x1] sm:$0x1]
      %v90 = vld [vmem:[#allocation7 + $0x2] sm:$0x1]
      %91 = vadd.xlane.f32.xlu0 %v86
      %v92 = vpop.xlane.xlu0 %91
      %93 = vadd.xlane.f32.xlu0 %v87
      %v94 = vpop.xlane.xlu0 %93
      %v95 = vmul.f32 %v92, 0.03125
      %v96 = vmul.f32 %v94, 0.03125
      %v97 = vsub.f32 %v86, %v95
      %v98 = vsub.f32 %v87, %v96
      %v99 = vlaneseq
      %v100 = vand.u32 %v99, 127
      %vm101 = vcmp.lt.s32.totalorder %v100, 32
      %v102 = vmul.f32 %v97, %v97
      %v103 = vmul.f32 %v98, %v98
      %v104 = vsel %vm101, 1, 0
      %vm105 = vcmp.eq.s32.totalorder %v104, 1
      %v106 = vsel %vm105, %v102, 0.0
      %v107 = vsel %vm105, %v103, 0.0
      %108 = vadd.xlane.f32.xlu0 %v106
      %v109 = vpop.xlane.xlu0 %108
      %110 = vadd.xlane.f32.xlu0 %v107
      %v111 = vpop.xlane.xlu0 %110
      %v112 = vmul.f32 %v109, 0.03125
      %v113 = vmul.f32 %v111, 0.03125
      %v114 = vadd.f32 %v112, 1e-05
      %v115 = vadd.f32 %v113, 1e-05
      %v116 = vrsqrt.pop %v114
      %v117 = vmul.f32 %v116, %v114
      %v118 = vmul.f32 %v117, %v116
      %v119 = vmul.f32 0.5, %v118
      %v120 = vsub.f32 1.5, %v119
      %v121 = vmul.f32 %v116, %v120
      %vm122 = vweird.f32 %v114
      %vm123 = vweird.f32 %v116
      %vm124 = vmor %vm122, %vm123
      %v125 = vsel %vm124, %v116, %v121
      %v126 = vrsqrt.pop %v115
      %v127 = vmul.f32 %v126, %v115
      %v128 = vmul.f32 %v127, %v126
      %v129 = vmul.f32 0.5, %v128
      %v130 = vsub.f32 1.5, %v129
      %v131 = vmul.f32 %v126, %v130
      %vm132 = vweird.f32 %v115
      %vm133 = vweird.f32 %v126
      %vm134 = vmor %vm132, %vm133
      %v135 = vsel %vm134, %v126, %v131
      %v136 = vmul.f32 %v97, %v125
      %v137 = vmul.f32 %v98, %v135
      %v138 = vperm.slane %v88, 0
      %v139 = vmul.f32 %v136, %v138
      %v140 = vmul.f32 %v137, %v138
      %v141 = vperm.slane %v89, 0
      %v142 = vadd.f32 %v139, %v141
      %v143 = vadd.f32 %v140, %v141
      %v144 = vmax.f32 %v142, 0.0
      %v145 = vmax.f32 %v143, 0.0
      %146 = vst [vmem:[#allocation2] sm:$0xff] %v144
      %147 = vst [vmem:[#allocation2 + $0x8] sm:$0xff] %v145
      %v148 = vperm.slane %v90, 0
      %v149 = vadd.f32 %v86, %v148
      %v150 = vadd.f32 %v87, %v148
      %151 = vst [vmem:[#allocation3] sm:$0xff] %v149
      %152 = vst [vmem:[#allocation3 + $0x8] sm:$0xff] %v150
    $region41: #{tpu_custom_call.1} parent=1 // pred_fallthru
      _
    %v153 = vld [vmem:[#allocation2] sm:$0xff]
    %v154 = vld [vmem:[#allocation2 + $0x8] sm:$0xff]
    %v155 = vld [vmem:[#allocation9] sm:$0xff]
    %v156 = vld [vmem:[#allocation9 + $0x8] sm:$0xff]
    %v157 = vld [vmem:[#allocation9 + $0x10] sm:$0xff]
    %v158 = vld [vmem:[#allocation9 + $0x18] sm:$0xff]
    %v159 = vld [vmem:[#allocation9 + $0x20] sm:$0xff]
    %v160 = vld [vmem:[#allocation9 + $0x28] sm:$0xff]
    %v161 = vld [vmem:[#allocation9 + $0x30] sm:$0xff]
    %v162 = vld [vmem:[#allocation9 + $0x38] sm:$0xff]
    %v163 = vld [vmem:[#allocation9 + $0x40] sm:$0xff]
    %v164 = vld [vmem:[#allocation9 + $0x48] sm:$0xff]
    %v165 = vld [vmem:[#allocation9 + $0x50] sm:$0xff]
    %v166 = vld [vmem:[#allocation9 + $0x58] sm:$0xff]
    %v167 = vld [vmem:[#allocation9 + $0x60] sm:$0xff]
    %v168 = vld [vmem:[#allocation9 + $0x68] sm:$0xff]
    %v169 = vld [vmem:[#allocation9 + $0x70] sm:$0xff]
    %v170 = vld [vmem:[#allocation9 + $0x78] sm:$0xff]
    %v171 = vld [vmem:[%s3] sm:$0x1]
    %v173 = vperm.slane %v171, 0
    %175 = vmatpush.msra.mxu0 %v170
    %176 = vmatpush.msra.mxu0 %v169
    %177 = vmatpush.msra.mxu0 %v168
    %178 = vmatpush.msra.mxu0 %v167
    %179 = vmatpush.msra.mxu0 %v166
    %180 = vmatpush.msra.mxu0 %v165
    %181 = vmatpush.msra.mxu0 %v164
    %182 = vmatpush.msra.mxu0 %v163
    %183 = vmatpush.msra.mxu0 %v162
    %184 = vmatpush.msra.mxu0 %v161
    %185 = vmatpush.msra.mxu0 %v160
    %186 = vmatpush.msra.mxu0 %v159
    %187 = vmatpush.msra.mxu0 %v158
    %188 = vmatpush.msra.mxu0 %v157
    %189 = vmatpush.msra.mxu0 %v156
    %190 = vmatpush.msra.mxu0 %v155
    %191 = vmatmul.f32.gmra.mxu0 %v153
    %v192 = vpop.f32.mrf.mxu0
    %v193 = vadd.f32 %v173, %v192
    %194 = vmatmul.f32.gmra.mxu0 %v154
    %v195 = vpop.f32.mrf.mxu0
    %v196 = vadd.f32 %v173, %v195
    %197 = vdwg.mxu0
    %v198 = vmax.f32 %v193, 0.0
    %v199 = vmax.f32 %v196, 0.0
    %v200 = vld [vmem:[#allocation3] sm:$0xff]
    %v201 = vld [vmem:[#allocation3 + $0x8] sm:$0xff]
    %v202 = vld [vmem:[#allocation10] sm:$0xff]
    %v203 = vld [vmem:[#allocation10 + $0x8] sm:$0xff]
    %v204 = vld [vmem:[#allocation10 + $0x10] sm:$0xff]
    %v205 = vld [vmem:[#allocation10 + $0x18] sm:$0xff]
    %v206 = vld [vmem:[#allocation10 + $0x20] sm:$0xff]
    %v207 = vld [vmem:[#allocation10 + $0x28] sm:$0xff]
    %v208 = vld [vmem:[#allocation10 + $0x30] sm:$0xff]
    %v209 = vld [vmem:[#allocation10 + $0x38] sm:$0xff]
    %v210 = vld [vmem:[#allocation10 + $0x40] sm:$0xff]
    %v211 = vld [vmem:[#allocation10 + $0x48] sm:$0xff]
    %v212 = vld [vmem:[#allocation10 + $0x50] sm:$0xff]
    %v213 = vld [vmem:[#allocation10 + $0x58] sm:$0xff]
    %v214 = vld [vmem:[#allocation10 + $0x60] sm:$0xff]
    %v215 = vld [vmem:[#allocation10 + $0x68] sm:$0xff]
    %v216 = vld [vmem:[#allocation10 + $0x70] sm:$0xff]
    %v217 = vld [vmem:[#allocation10 + $0x78] sm:$0xff]
    %218 = vmatpush.msra.mxu0 %v217
    %219 = vmatpush.msra.mxu0 %v216
    %220 = vmatpush.msra.mxu0 %v215
    %221 = vmatpush.msra.mxu0 %v214
    %222 = vmatpush.msra.mxu0 %v213
    %223 = vmatpush.msra.mxu0 %v212
    %224 = vmatpush.msra.mxu0 %v211
    %225 = vmatpush.msra.mxu0 %v210
    %226 = vmatpush.msra.mxu0 %v209
    %227 = vmatpush.msra.mxu0 %v208
    %228 = vmatpush.msra.mxu0 %v207
    %229 = vmatpush.msra.mxu0 %v206
    %230 = vmatpush.msra.mxu0 %v205
    %231 = vmatpush.msra.mxu0 %v204
    %232 = vmatpush.msra.mxu0 %v203
    %233 = vmatpush.msra.mxu0 %v202
    %234 = vmatmul.f32.gmra.mxu0 %v198
    %v235 = vpop.f32.mrf.mxu0
    %v236 = vadd.f32 0.0, %v235
    %237 = vmatmul.f32.gmra.mxu0 %v199
    %v238 = vpop.f32.mrf.mxu0
    %v239 = vadd.f32 0.0, %v238
    %240 = vdwg.mxu0
    %v241 = vadd.f32 %v200, %v236
    %v242 = vadd.f32 %v201, %v239
    %243 = vst [vmem:[#allocation3] sm:$0xff] %v241
    %244 = vst [vmem:[#allocation3 + $0x8] sm:$0xff] %v242
    // Predicated region
    $region42: #{tpu_custom_call.1} parent=1 // pred_check
      %p245 = pneg %p82
    $region43: #{tpu_custom_call.1} parent=1 // pred_check_branch
      %247 = sbr.rel (%p245) target = $region45
    $region44: #{tpu_custom_call.1} parent=1 // pred_region
      %v248 = vld [vmem:[#allocation3] sm:$0xff]
      %v249 = vld [vmem:[#allocation3 + $0x8] sm:$0xff]
      %250 = vst [vmem:[#allocation12] sm:$0xff] %v248
      %251 = vst [vmem:[#allocation12 + $0x8] sm:$0xff] %v249
    $region45: #{tpu_custom_call.1} parent=1 // pred_fallthru
      _
    // Predicated region
    $region46: #{tpu_custom_call.1} parent=1 // pred_check
      _
    $region47: #{tpu_custom_call.1} parent=1 // pred_check_branch
      %253 = sbr.rel (0) target = $region49
    $region48: #{tpu_custom_call.1} parent=1 // pred_region
      %255 = vsyncadd [#allocation6], 0
      %s256 = sshll.u32 [#allocation12], 4
      %s257 = int_to_ptr.vmem [resolvable:$true] %s256
      %s258 = sshll.u32 %s5, 4
      %s259 = int_to_ptr.hbm [resolvable:$true] %s258
      %264 = dma.vmem_to_hbm [thread:$0]  %s257, 256, %s259, [#allocation6], 128, 128, 8
    $region49: #{tpu_custom_call.1} parent=1 // pred_fallthru
      _
    // Predicated region
    $region50: #{tpu_custom_call.1} parent=1 // pred_check
      _
    $region51: #{tpu_custom_call.1} parent=1 // pred_check_branch
      %266 = sbr.rel (0) target = $region53
    $region52: #{tpu_custom_call.1} parent=1 // pred_region
      %268 = dma.done [#allocation6], 256
    $region53: #{tpu_custom_call.1} parent=1 // pred_fallthru
      _
    %269 = vsyncpa [#allocation5], 1
    %270 = vsyncpa [#allocation8], 1
    %271 = vsyncpa [#allocation11], 1
    %272 = vsyncpa [#allocation6], 1

</llo_original>
